<compile_context>
chip_gen: v5e
topology: v5e:2x2
jax: 0.10.0
libtpu: 0.0.40
codegen_flags: <defaults>
</compile_context>

<pallas_src>
import functools

import jax
import jax.numpy as jnp
from jax.experimental import pallas as pl
from jax.experimental.pallas import tpu as pltpu


def _round_up(a, b):
    return ((a + b - 1) // b) * b


def _sublane_multiple(dtype):
    # second-minor tiling minimum per dtype width
    return {4: 8, 2: 16, 1: 32}.get(jnp.dtype(dtype).itemsize, 8)


def _pick_tile(total, want):
    """Largest multiple of 128 <= want that divides `total` (total is a 128-multiple)."""
    t = max(128, min(want, total) - (min(want, total) % 128))
    while total % t != 0:
        t -= 128
    return t


# ----------------------------- kernels --------------------------------------

def _pcbm_kernel(x_ref, w_ref, b_ref, o_ref, acc_ref, *, compute_dtype):
    # General path. grid = (M tiles, N tiles, K tiles); K last (reduction).
    # x_ref: (tm, tk), w_ref: (tk, tn) [pre-transposed], b_ref: (1, tn),
    # o_ref: (tm, tn), acc_ref: (tm, tn) f32, persistent across the K axis.
    k = pl.program_id(2)

    @pl.when(k == 0)
    def _():
        acc_ref[...] = jnp.zeros_like(acc_ref)

    acc_ref[...] += jnp.dot(
        x_ref[...].astype(compute_dtype),
        w_ref[...].astype(compute_dtype),
        preferred_element_type=jnp.float32)

    @pl.when(k == pl.num_programs(2) - 1)
    def _():
        o_ref[...] = (acc_ref[...] + b_ref[...].astype(jnp.float32)).astype(o_ref.dtype)


def _pcbm_small_m_kernel(x_ref, w_ref, b_ref, o_ref, *, compute_dtype):
    # Small-M fast path: whole (M_p, K_p) x resident; grid streams N panels.
    acc = jnp.dot(
        x_ref[...].astype(compute_dtype),
        w_ref[...].astype(compute_dtype),
        preferred_element_type=jnp.float32)
    o_ref[...] = (acc + b_ref[...].astype(jnp.float32)).astype(o_ref.dtype)


# --------------------------- parameter prep ---------------------------------

def prepare_pcbm_params(weight, bias, *, weight_dtype=None):
    """One-time (init-time) parameter prep.

    weight: (N, K) torch nn.Linear layout.  Returns:
      w_t   : (K_p, N_p) transposed, zero-padded to 128-multiples (optionally bf16)
      b_row : (1, N_p)   zero-padded bias (kept f32)
      n_out : N          true output width (for the final slice)
    """
    N, K = weight.shape
    K_p = _round_up(K, 128)
    N_p = _round_up(N, 128)
    w_t = weight.T  # (K, N)
    if (K_p, N_p) != (K, N):
        w_t = jnp.pad(w_t, ((0, K_p - K), (0, N_p - N)))
    if weight_dtype is not None:
        w_t = w_t.astype(weight_dtype)
    b_row = bias.reshape(1, N)
    if N_p != N:
        b_row = jnp.pad(b_row, ((0, 0), (0, N_p - N)))
    return w_t, b_row, N


# ------------------------------ forward --------------------------------------

def pcbm_forward(x, w_t, b_row, n_out, *, tm=None, tn=None, tk=None,
                 compute_dtype=None):
    """y = x @ W^T + b with W pre-transposed/padded by prepare_pcbm_params."""
    M, K = x.shape
    K_p, N_p = w_t.shape
    assert K <= K_p and K_p - K < 128, "x feature dim inconsistent with prepared weight"

    out_dtype = x.dtype
    cd = jnp.dtype(compute_dtype) if compute_dtype is not None else jnp.dtype(x.dtype)
    it_x = jnp.dtype(x.dtype).itemsize
    it_w = jnp.dtype(w_t.dtype).itemsize
    it_o = jnp.dtype(out_dtype).itemsize

    sub = _sublane_multiple(x.dtype)
    M_min = _round_up(M, sub)

    cost = pl.CostEstimate(
        flops=2 * M * n_out * K,
        transcendentals=0,
        bytes_accessed=it_x * M * K + it_w * K_p * N_p + it_o * M * n_out)

    # ---------------- small-M fast path (no K axis, no accumulator) ----------
    if tm is None and tk is None and M_min <= 512:
        tn_f = _pick_tile(N_p, tn if tn is not None else min(512, N_p))
        if N_p // tn_f < 2 and N_p >= 256:
            # keep >= 2 N panels so v7x megacore can shard the grid
            tn_f = _pick_tile(N_p, N_p // 2)
        ws_fast = 2 * M_min * K_p * it_x + 2 * K_p * tn_f * it_w + 2 * M_min * tn_f * it_o
        if ws_fast <= 12 * (1 << 20):
            x_p = x
            if (M_min != M) or (K_p != K):
                x_p = jnp.pad(x, ((0, M_min - M), (0, K_p - K)))
            out_p = pl.pallas_call(
                functools.partial(_pcbm_small_m_kernel, compute_dtype=cd),
                out_shape=jax.ShapeDtypeStruct((M_min, N_p), out_dtype),
                grid_spec=pltpu.PrefetchScalarGridSpec(
                    num_scalar_prefetch=0,
                    grid=(N_p // tn_f,),
                    in_specs=[
                        pl.BlockSpec((M_min, K_p), lambda j: (0, 0)),  # x resident
                        pl.BlockSpec((K_p, tn_f), lambda j: (0, j)),   # weight panel
                        pl.BlockSpec((1, tn_f), lambda j: (0, j)),     # bias panel
                    ],
                    out_specs=pl.BlockSpec((M_min, tn_f), lambda j: (0, j)),
                ),
                compiler_params=pltpu.CompilerParams(
                    dimension_semantics=("parallel",)),
                cost_estimate=cost,
            )(x_p, w_t, b_row)
            return out_p[:M, :n_out]

    # ---------------- general tiled path (M, N, K with f32 accumulator) ------
    if tm is None:
        tm = min(1024, M_min)
    tm = _round_up(tm, sub)
    tn = _pick_tile(N_p, tn if tn is not None else 512)
    tk = _pick_tile(K_p, tk if tk is not None else 512)

    M_p = _round_up(M, tm)
    x_p = x
    if (M_p != M) or (K_p != K):
        x_p = jnp.pad(x, ((0, M_p - M), (0, K_p - K)))

    grid = (M_p // tm, N_p // tn, K_p // tk)  # reduction axis (K) MUST stay last

    # double-buffered working set; raise scoped VMEM only if we exceed v5e's 16 MiB default
    ws = 2 * tm * tk * it_x + 2 * tk * tn * it_w + 2 * tm * tn * it_o + tm * tn * 4
    cp_kwargs = dict(dimension_semantics=("parallel", "parallel", "arbitrary"))
    if ws > 14 * (1 << 20):
        cp_kwargs["vmem_limit_bytes"] = int(ws * 1.25)

    out_p = pl.pallas_call(
        functools.partial(_pcbm_kernel, compute_dtype=cd),
        out_shape=jax.ShapeDtypeStruct((M_p, N_p), out_dtype),
        grid_spec=pltpu.PrefetchScalarGridSpec(
            num_scalar_prefetch=0,
            grid=grid,
            in_specs=[
                pl.BlockSpec((tm, tk), lambda i, j, k: (i, k)),   # x tile
                pl.BlockSpec((tk, tn), lambda i, j, k: (k, j)),   # weight tile (K, N)
                pl.BlockSpec((1, tn), lambda i, j, k: (0, j)),    # bias tile
            ],
            out_specs=pl.BlockSpec((tm, tn), lambda i, j, k: (i, j)),
            scratch_shapes=[pltpu.VMEM((tm, tn), jnp.float32)],
        ),
        compiler_params=pltpu.CompilerParams(**cp_kwargs),
        cost_estimate=cost,
    )(x_p, w_t, b_row)
    return out_p[:M, :n_out]


# ------------------------------- demo ----------------------------------------

if __name__ == "__main__":
    key = jax.random.PRNGKey(0)
    k1, k2, k3, k4 = jax.random.split(key, 4)

    # Case 1: small shapes consistent with PCBM(ip_size=32, op_size=16), batch=8
    # (exercises the small-M fast path).
    batch, ip_size, op_size = 8, 32, 16
    x = jax.random.normal(k1, (batch, ip_size), dtype=jnp.float32)
    bound = 1.0 / (ip_size ** 0.5)
    weight = jax.random.uniform(k2, (op_size, ip_size), jnp.float32, -bound, bound)
    bias = jax.random.uniform(k3, (op_size,), jnp.float32, -bound, bound)

    w_t, b_row, n_out = prepare_pcbm_params(weight, bias)
    y = jax.block_until_ready(pcbm_forward(x, w_t, b_row, n_out))
    y_ref = x @ weight.T + bias
    assert y.shape == (batch, op_size)
    assert jnp.allclose(y, y_ref, atol=1e-5, rtol=1e-5)

    # Case 1b: bf16 MXU feeding (weight stored bf16 once at init, f32 accumulate).
    w_t_bf, b_row_bf, n_out_bf = prepare_pcbm_params(weight, bias,
                                                     weight_dtype=jnp.bfloat16)
    y_bf = jax.block_until_ready(
        pcbm_forward(x, w_t_bf, b_row_bf, n_out_bf, compute_dtype=jnp.bfloat16))
    assert jnp.allclose(y_bf, y_ref, atol=5e-2, rtol=5e-2)

    # Case 2: ragged shapes with explicit small tiles to exercise the general
    # tiled path (multi-step K reduction, accumulator init/epilogue, padding).
    M2, K2, N2 = 600, 300, 144
    x2 = jax.random.normal(k4, (M2, K2), dtype=jnp.float32)
    kw2, kb2 = jax.random.split(jax.random.PRNGKey(1), 2)
    bound2 = 1.0 / (K2 ** 0.5)
    w2 = jax.random.uniform(kw2, (N2, K2), jnp.float32, -bound2, bound2)
    b2 = jax.random.uniform(kb2, (N2,), jnp.float32, -bound2, bound2)
    w2_t, b2_row, n2_out = prepare_pcbm_params(w2, b2)
    y2 = jax.block_until_ready(
        pcbm_forward(x2, w2_t, b2_row, n2_out, tm=256, tn=128, tk=128))
    y2_ref = x2 @ w2.T + b2
    assert y2.shape == (M2, N2)
    assert jnp.allclose(y2, y2_ref, atol=1e-4, rtol=1e-4)

    print("KERNEL_OK")
</pallas_src>

<mosaic_0001>
module attributes {stable_mosaic.version = 11 : i64} {
  func.func @_pcbm_small_m_kernel(%arg0: i32, %arg1: memref<8x128xf32, #tpu.memory_space<vmem>>, %arg2: memref<128x128xf32, #tpu.memory_space<vmem>>, %arg3: memref<1x128xf32, #tpu.memory_space<vmem>>, %arg4: memref<8x128xf32, #tpu.memory_space<vmem>>) attributes {dimension_semantics = [#tpu.dimension_semantics<parallel>], iteration_bounds = array<i64: 1>, scalar_prefetch = 0 : i64, scratch_operands = 0 : i64, tpu.core_type = #tpu.core_type<tc>, window_params = [{pipeline_mode = #tpu.pipeline_mode<synchronous>, transform_indices = @transform_0, window_bounds = array<i64: 8, 128>}, {transform_indices = @transform_1, window_bounds = array<i64: 128, 128>}, {transform_indices = @transform_2, window_bounds = array<i64: 1, 128>}, {transform_indices = @transform_3, window_bounds = array<i64: 8, 128>}]} {
    %c0 = arith.constant 0 : index
    %c0_0 = arith.constant 0 : index
    %0 = vector.load %arg1[%c0, %c0_0] : memref<8x128xf32, #tpu.memory_space<vmem>>, vector<8x128xf32>
    %c0_1 = arith.constant 0 : index
    %c0_2 = arith.constant 0 : index
    %1 = vector.load %arg2[%c0_1, %c0_2] : memref<128x128xf32, #tpu.memory_space<vmem>>, vector<128x128xf32>
    %cst = arith.constant dense<0.000000e+00> : vector<8x128xf32>
    %2 = tpu.matmul %0, %1, %cst {dimension_numbers = #tpu.dot_dimension_numbers<[1], [0], [0], [1], [0, 0, 1, 1], [], []>} : vector<8x128xf32>, vector<128x128xf32>, vector<8x128xf32> -> vector<8x128xf32>
    %c0_3 = arith.constant 0 : index
    %c0_4 = arith.constant 0 : index
    %3 = vector.load %arg3[%c0_3, %c0_4] : memref<1x128xf32, #tpu.memory_space<vmem>>, vector<1x128xf32>
    %4 = vector.broadcast %3 : vector<1x128xf32> to vector<8x128xf32>
    %5 = arith.addf %2, %4 : vector<8x128xf32>
    %c0_5 = arith.constant 0 : index
    %c0_6 = arith.constant 0 : index
    %6 = vector.load %arg4[%c0_5, %c0_6] : memref<8x128xf32, #tpu.memory_space<vmem>>, vector<8x128xf32>
    tpu.vector_store %arg4[%c0_5, %c0_6], %5 {strides = array<i32>} : memref<8x128xf32, #tpu.memory_space<vmem>>, vector<8x128xf32>,
    return
  }
  func.func @transform_0(%arg0: i32) -> (i32, i32) {
    %c0_i32 = arith.constant 0 : i32
    %c0_i32_0 = arith.constant 0 : i32
    %c0_i32_1 = arith.constant 0 : i32
    return %c0_i32, %c0_i32_0 : i32, i32
  }
  func.func @transform_1(%arg0: i32) -> (i32, i32) {
    %c0_i32 = arith.constant 0 : i32
    %c0_i32_0 = arith.constant 0 : i32
    return %c0_i32, %arg0 : i32, i32
  }
  func.func @transform_2(%arg0: i32) -> (i32, i32) {
    %c0_i32 = arith.constant 0 : i32
    %c0_i32_0 = arith.constant 0 : i32
    return %c0_i32, %arg0 : i32, i32
  }
  func.func @transform_3(%arg0: i32) -> (i32, i32) {
    %c0_i32 = arith.constant 0 : i32
    %c0_i32_0 = arith.constant 0 : i32
    return %c0_i32, %arg0 : i32, i32
  }
}

</mosaic_0001>

<llo_original>
// kernel: tpu_custom_call.1
$region0: #{tpu_custom_call.1}
  #allocation0 [shape = 'u32[]', space=smem, size = 0x4, offset = 0x4, fixed_abs, tag = 'smem constant byte address 0x4 - core index']
  #allocation1 [shape = 'u32[72,128]{1,0:T(1,128)}', space=vmem, size = 0x9000, scoped, tag = 'internal scratch']
  %s0 = inlined_call_operand.hbm [shape: f32[8,128], index: 0, kind: input, shape index: {}]
  %s1 = inlined_call_operand.hbm [shape: f32[128,128], index: 1, kind: input, shape index: {}]
  %s2 = inlined_call_operand.vmem [shape: f32[1,128], index: 2, kind: input, shape index: {}]
  %s3 = inlined_call_operand.hbm [shape: f32[8,128], index: 3, kind: output, shape index: {}]
  %s4 = sld [smem:[#allocation0]]
  $region30: #{tpu_custom_call.1} parent=0
    _
  %s6 = ssub.s32 1, %s4
  %s7 = scalar_select 0, %s6, %s4
  $region1: #{tpu_custom_call.1} parent=0
    #allocation2 [shape = 'u8[4096]{0}', space=vmem, size = 0x1000, scoped, tag = 'input window, operand 0, single buffered']
    #allocation3 [shape = 's32[1]{0}', space=sflag, size = 0x4, scoped, tag = 'scoped memory for tpu_custom_call.1']
    #allocation4 [shape = 's32[1]{0}', space=sflag, size = 0x4, scoped, tag = 'scoped memory for tpu_custom_call.1']
    #allocation5 [shape = 'u8[65536]{0}', space=vmem, size = 0x10000, scoped, tag = 'input window, operand 1, single buffered']
    #allocation6 [shape = 's32[1]{0}', space=sflag, size = 0x4, scoped, tag = 'scoped memory for tpu_custom_call.1']
    #allocation7 [shape = 'u8[4096]{0}', space=vmem, size = 0x1000, scoped, tag = 'output window, operand 0, single buffered']
    %8 = vsyncpa [#allocation3], 0
    %9 = vsyncpa [#allocation6], 0
    %10 = vsyncpa [#allocation4], 0
    // Predicated region
    $region2: #{tpu_custom_call.1} parent=1 // pred_check
      _
    $region3: #{tpu_custom_call.1} parent=1 // pred_check_branch
      %12 = sbr.rel (0) target = $region5
    $region4: #{tpu_custom_call.1} parent=1 // pred_region
      %14 = vsyncadd [#allocation3], 0
      %s16 = sshll.u32 %s0, 4
      %s17 = int_to_ptr.hbm [resolvable:$true] %s16
      %s18 = sshll.u32 [#allocation2], 4
      %s19 = int_to_ptr.vmem [resolvable:$true] %s18
      %21 = dma.hbm_to_vmem [thread:$0]  %s17, 128, %s19, [#allocation3]
    $region5: #{tpu_custom_call.1} parent=1 // pred_fallthru
      _
    // Predicated region
    $region6: #{tpu_custom_call.1} parent=1 // pred_check
      _
    $region7: #{tpu_custom_call.1} parent=1 // pred_check_branch
      %23 = sbr.rel (0) target = $region9
    $region8: #{tpu_custom_call.1} parent=1 // pred_region
      %25 = vsyncadd [#allocation6], 0
      %s26 = sshll.u32 %s1, 4
      %s27 = int_to_ptr.hbm [resolvable:$true] %s26
      %s28 = sshll.u32 [#allocation5], 4
      %s29 = int_to_ptr.vmem [resolvable:$true] %s28
      %34 = dma.hbm_to_vmem [thread:$0]  %s27, 2048, %s29, [#allocation6], 128, 128, 8
    $region9: #{tpu_custom_call.1} parent=1 // pred_fallthru
      _
    // Predicated region
    $region10: #{tpu_custom_call.1} parent=1 // pred_check
      _
    $region11: #{tpu_custom_call.1} parent=1 // pred_check_branch
      %36 = sbr.rel (0) target = $region13
    $region12: #{tpu_custom_call.1} parent=1 // pred_region
      _
    $region13: #{tpu_custom_call.1} parent=1 // pred_fallthru
      _
    // Predicated region
    $region14: #{tpu_custom_call.1} parent=1 // pred_check
      _
    $region15: #{tpu_custom_call.1} parent=1 // pred_check_branch
      %38 = sbr.rel (0) target = $region17
    $region16: #{tpu_custom_call.1} parent=1 // pred_region
      %40 = dma.done [#allocation3], 128
    $region17: #{tpu_custom_call.1} parent=1 // pred_fallthru
      _
    // Predicated region
    $region18: #{tpu_custom_call.1} parent=1 // pred_check
      _
    $region19: #{tpu_custom_call.1} parent=1 // pred_check_branch
      %42 = sbr.rel (0) target = $region21
    $region20: #{tpu_custom_call.1} parent=1 // pred_region
      %44 = dma.done [#allocation6], 2048
    $region21: #{tpu_custom_call.1} parent=1 // pred_fallthru
      _
    %v45 = vld [vmem:[#allocation2] sm:$0xff]
    %v46 = vld [vmem:[#allocation5] sm:$0xff]
    %v47 = vld [vmem:[#allocation5 + $0x8] sm:$0xff]
    %v48 = vld [vmem:[#allocation5 + $0x10] sm:$0xff]
    %v49 = vld [vmem:[#allocation5 + $0x18] sm:$0xff]
    %v50 = vld [vmem:[#allocation5 + $0x20] sm:$0xff]
    %v51 = vld [vmem:[#allocation5 + $0x28] sm:$0xff]
    %v52 = vld [vmem:[#allocation5 + $0x30] sm:$0xff]
    %v53 = vld [vmem:[#allocation5 + $0x38] sm:$0xff]
    %v54 = vld [vmem:[#allocation5 + $0x40] sm:$0xff]
    %v55 = vld [vmem:[#allocation5 + $0x48] sm:$0xff]
    %v56 = vld [vmem:[#allocation5 + $0x50] sm:$0xff]
    %v57 = vld [vmem:[#allocation5 + $0x58] sm:$0xff]
    %v58 = vld [vmem:[#allocation5 + $0x60] sm:$0xff]
    %v59 = vld [vmem:[#allocation5 + $0x68] sm:$0xff]
    %v60 = vld [vmem:[#allocation5 + $0x70] sm:$0xff]
    %v61 = vld [vmem:[#allocation5 + $0x78] sm:$0xff]
    %v62 = vld [vmem:[%s2] sm:$0x1]
    %v64 = vperm.slane %v62, 0
    %66 = vmatpush.msra.mxu0 %v61
    %67 = vmatpush.msra.mxu0 %v60
    %68 = vmatpush.msra.mxu0 %v59
    %69 = vmatpush.msra.mxu0 %v58
    %70 = vmatpush.msra.mxu0 %v57
    %71 = vmatpush.msra.mxu0 %v56
    %72 = vmatpush.msra.mxu0 %v55
    %73 = vmatpush.msra.mxu0 %v54
    %74 = vmatpush.msra.mxu0 %v53
    %75 = vmatpush.msra.mxu0 %v52
    %76 = vmatpush.msra.mxu0 %v51
    %77 = vmatpush.msra.mxu0 %v50
    %78 = vmatpush.msra.mxu0 %v49
    %79 = vmatpush.msra.mxu0 %v48
    %80 = vmatpush.msra.mxu0 %v47
    %81 = vmatpush.msra.mxu0 %v46
    %82 = vmatmul.f32.gmra.mxu0 %v45
    %v83 = vpop.f32.mrf.mxu0
    %v84 = vadd.f32 %v64, %v83
    %85 = vdwg.mxu0
    %86 = vst [vmem:[#allocation7] sm:$0xff] %v84
    // Predicated region
    $region22: #{tpu_custom_call.1} parent=1 // pred_check
      _
    $region23: #{tpu_custom_call.1} parent=1 // pred_check_branch
      %88 = sbr.rel (0) target = $region25
    $region24: #{tpu_custom_call.1} parent=1 // pred_region
      %90 = vsyncadd [#allocation4], 0
      %s92 = sshll.u32 [#allocation7], 4
      %s93 = int_to_ptr.vmem [resolvable:$true] %s92
      %s94 = sshll.u32 %s3, 4
      %s95 = int_to_ptr.hbm [resolvable:$true] %s94
      %97 = dma.vmem_to_hbm [thread:$0]  %s93, 128, %s95, [#allocation4]
    $region25: #{tpu_custom_call.1} parent=1 // pred_fallthru
      _
    // Predicated region
    $region26: #{tpu_custom_call.1} parent=1 // pred_check
      _
    $region27: #{tpu_custom_call.1} parent=1 // pred_check_branch
      %99 = sbr.rel (0) target = $region29
    $region28: #{tpu_custom_call.1} parent=1 // pred_region
      %101 = dma.done [#allocation4], 128
    $region29: #{tpu_custom_call.1} parent=1 // pred_fallthru
      _
    %102 = vsyncpa [#allocation3], 1
    %103 = vsyncpa [#allocation6], 1
    %104 = vsyncpa [#allocation4], 1

</llo_original>
